<compile_context>
chip_gen: v7x
topology: tpu7x:2x2x1
jax: 0.10.0
libtpu: 0.0.40
codegen_flags: <defaults>
</compile_context>

<pallas_src>
import functools

import jax
import jax.numpy as jnp
from jax import lax
from jax.experimental import pallas as pl
from jax.experimental.pallas import tpu as pltpu


def _focal_loss_kernel(x_ref, t_ref, out_ref, *, gamma: float,
                       n_valid: int, row_tile: int):
    """x_ref: (TN, C) logits tile; t_ref: (TN, 1) i32; out_ref: (1, 1) f32."""
    i = pl.program_id(0)

    x = x_ref[...]
    # bf16 inputs: keep big-tensor math in bf16 (bf16 EUP/VPU on v6e/v7x) and
    # widen only the reductions; everything else computes in f32.
    if x.dtype != jnp.bfloat16:
        x = x.astype(jnp.float32)
    tn, c = x.shape
    t = t_ref[...]                                        # (TN, 1) int32

    # one-hot selection of the target logit
    class_ids = lax.broadcasted_iota(jnp.int32, (tn, c), 1)
    onehot = class_ids == t                               # (TN, C) bool

    # numerically stable cross entropy, single exp pass over the big tile:
    #   d = x - max(x);  CE = log(sum(exp(d))) - d[target]
    m = jnp.max(x, axis=-1, keepdims=True)                # (TN, 1)
    d = x - m                                             # (TN, C)
    e = jnp.exp(d)                                        # (TN, C)  EUP
    s = jnp.sum(e.astype(jnp.float32), axis=-1, keepdims=True)        # (TN, 1) f32
    d_t = jnp.sum(jnp.where(onehot, d, 0).astype(jnp.float32),
                  axis=-1, keepdims=True)                              # (TN, 1) f32
    ce = jnp.log(s) - d_t                                 # (TN, 1) f32

    # focal weight; per-row exp on a (TN, 1) vector is negligible vs the tile
    p = jnp.exp(-ce)
    one_minus_p = jnp.maximum(1.0 - p, 0.0)               # clamp ulp-negatives

    if gamma == 0.0:
        w = jnp.ones_like(one_minus_p)
    elif float(gamma).is_integer() and 1.0 <= gamma <= 4.0:
        # specialize small integer gamma: plain multiplies, no log/exp power
        w = one_minus_p
        for _ in range(int(gamma) - 1):
            w = w * one_minus_p
    else:
        w = jnp.power(one_minus_p, gamma)

    loss = w * ce                                         # (TN, 1) f32

    # mask rows that lie past the end of the array (ragged last block)
    row_ids = i * row_tile + lax.broadcasted_iota(jnp.int32, (tn, 1), 0)
    loss = jnp.where(row_ids < n_valid, loss, 0.0)

    # one lane-dense-ish store per tile instead of row_tile masked stores
    out_ref[...] = jnp.sum(loss, axis=0, keepdims=True)   # (1, 1)


def _round_up(x: int, m: int) -> int:
    return -(-x // m) * m


def focal_loss(logits, targets, *, gamma: float = 1.0, _row_cap: int = 1024):
    """logits: [N, C] (any float dtype); targets: [N] int. Returns scalar f32 sum."""
    n, c = logits.shape
    itemsize = jnp.dtype(logits.dtype).itemsize
    padded_c = _round_up(c, 128)                          # lane padding of C

    # Per-row VMEM bytes, counting the 128-lane padding of every width-1 block
    # and the double-buffering of the pipelined inputs:
    #   logits block x2 buffers, (row,1) i32 targets x2 buffers (each row pads
    #   to a full 128-lane line), plus ~3 big (row, C) temps and a handful of
    #   (row, 1) temps inside the kernel body (upper bound).
    bytes_per_row = (2 * padded_c * itemsize              # logits, double buffered
                     + 2 * 128 * 4                        # targets, double buffered
                     + 3 * padded_c * 4                   # big compute temps
                     + 8 * 128 * 4)                       # (row, 1) temps
    vmem_budget = 20 * 1024 * 1024                        # headroom under 32 MiB scoped (v7x-safe)
    row_cap = max(8, min(_row_cap, vmem_budget // bytes_per_row))
    row_cap = (row_cap // 8) * 8                          # sublane-aligned tiles

    if n <= row_cap:
        row_tile = n            # single block == full array dims (no alignment constraint)
    else:
        row_tile = row_cap      # multiple of 8; ragged last block masked in-kernel

    num_tiles = pl.cdiv(n, row_tile)
    targets_2d = targets.astype(jnp.int32).reshape(n, 1)

    per_tile = pl.pallas_call(
        functools.partial(_focal_loss_kernel, gamma=float(gamma),
                          n_valid=n, row_tile=row_tile),
        out_shape=jax.ShapeDtypeStruct((num_tiles, 1), jnp.float32),
        grid_spec=pltpu.PrefetchScalarGridSpec(
            num_scalar_prefetch=0,
            grid=(num_tiles,),
            in_specs=[
                pl.BlockSpec((row_tile, c), lambda i: (i, 0)),   # logits, native dtype
                pl.BlockSpec((row_tile, 1), lambda i: (i, 0)),   # targets
            ],
            out_specs=pl.BlockSpec((1, 1), lambda i: (i, 0)),    # per-tile partial sum
        ),
        compiler_params=pltpu.CompilerParams(
            # independent row tiles, no cross-iteration carry
            dimension_semantics=("parallel",),
            vmem_limit_bytes=32 * 1024 * 1024,
        ),
        cost_estimate=pl.CostEstimate(
            flops=8 * n * c,
            transcendentals=n * c + 2 * n,
            bytes_accessed=n * c * itemsize + n * 4 + num_tiles * 4,
        ),
    )(logits, targets_2d)

    return jnp.sum(per_tile)


def _focal_loss_ref(logits, targets, gamma=1.0):
    # pure-JAX reference matching torch.nn.functional.cross_entropy semantics
    logp = jax.nn.log_softmax(logits.astype(jnp.float32), axis=-1)
    ce = -jnp.take_along_axis(logp, targets[:, None].astype(jnp.int32), axis=-1)[:, 0]
    p = jnp.exp(-ce)
    return jnp.sum((1.0 - p) ** gamma * ce)


if __name__ == "__main__":
    # FocalLoss(gamma=1.0, num_classes=80) -> logits have num_classes+1 = 81 cols.
    # N chosen not to be a multiple of 8/tile to exercise the unaligned path.
    N, C = 37, 81

    key = jax.random.PRNGKey(0)
    k_logits, k_tgt = jax.random.split(key)
    logits = jax.random.normal(k_logits, (N, C), dtype=jnp.float32)
    targets = jax.random.randint(k_tgt, (N,), 0, C, dtype=jnp.int32)

    # 1) default path: single block covering the whole (37, 81) input
    loss = jax.jit(functools.partial(focal_loss, gamma=1.0))(logits, targets)
    loss = jax.block_until_ready(loss)
    ref = _focal_loss_ref(logits, targets, 1.0)
    assert jnp.allclose(loss, ref, rtol=1e-5, atol=1e-5), (loss, ref)

    # 2) multi-tile path with a ragged last block (forced small row cap) and
    #    the integer-gamma>1 specialization.
    loss2 = jax.jit(functools.partial(focal_loss, gamma=2.0, _row_cap=16))(logits, targets)
    loss2 = jax.block_until_ready(loss2)
    ref2 = _focal_loss_ref(logits, targets, 2.0)
    assert jnp.allclose(loss2, ref2, rtol=1e-5, atol=1e-5), (loss2, ref2)

    print("KERNEL_OK")
</pallas_src>

<mosaic_0001>
module attributes {stable_mosaic.version = 11 : i64} {
  func.func @_focal_loss_kernel(%arg0: i32, %arg1: memref<37x81xf32, #tpu.memory_space<vmem>>, %arg2: memref<37x1xi32, #tpu.memory_space<vmem>>, %arg3: memref<1x1xf32, #tpu.memory_space<vmem>>) attributes {dimension_semantics = [#tpu.dimension_semantics<parallel>], iteration_bounds = array<i64: 1>, scalar_prefetch = 0 : i64, scratch_operands = 0 : i64, tpu.core_type = #tpu.core_type<tc>, window_params = [{transform_indices = @transform_0, window_bounds = array<i64: 37, 81>}, {transform_indices = @transform_1, window_bounds = array<i64: 37, 1>}, {transform_indices = @transform_2, window_bounds = array<i64: 1, 1>}]} {
    %c0 = arith.constant 0 : index
    %c0_0 = arith.constant 0 : index
    %0 = vector.load %arg1[%c0, %c0_0] : memref<37x81xf32, #tpu.memory_space<vmem>>, vector<37x81xf32>
    %c0_1 = arith.constant 0 : index
    %c0_2 = arith.constant 0 : index
    %1 = vector.load %arg2[%c0_1, %c0_2] : memref<37x1xi32, #tpu.memory_space<vmem>>, vector<37x1xi32>
    %2 = tpu.iota {dimensions = array<i32: 1>} : vector<37x81xi32>
    %3 = vector.broadcast %1 : vector<37x1xi32> to vector<37x81xi32>
    %4 = arith.cmpi eq, %2, %3 : vector<37x81xi32>
    %cst = arith.constant dense<0xFF800000> : vector<37xf32>
    %5 = vector.multi_reduction <maximumf>, %0, %cst [1] : vector<37x81xf32> to vector<37xf32>
    %6 = vector.shape_cast %5 : vector<37xf32> to vector<37x1xf32>
    %7 = vector.broadcast %6 : vector<37x1xf32> to vector<37x81xf32>
    %8 = arith.subf %0, %7 : vector<37x81xf32>
    %9 = math.exp %8 : vector<37x81xf32>
    %cst_3 = arith.constant dense<0.000000e+00> : vector<37xf32>
    %10 = vector.multi_reduction <add>, %9, %cst_3 [1] : vector<37x81xf32> to vector<37xf32>
    %11 = vector.shape_cast %10 : vector<37xf32> to vector<37x1xf32>
    %c0_i32 = arith.constant 0 : i32
    %12 = arith.sitofp %c0_i32 : i32 to f32
    %13 = vector.broadcast %12 : f32 to vector<37x81xf32>
    %14 = arith.select %4, %8, %13 : vector<37x81xi1>, vector<37x81xf32>
    %cst_4 = arith.constant dense<0.000000e+00> : vector<37xf32>
    %15 = vector.multi_reduction <add>, %14, %cst_4 [1] : vector<37x81xf32> to vector<37xf32>
    %16 = vector.shape_cast %15 : vector<37xf32> to vector<37x1xf32>
    %17 = math.log %11 : vector<37x1xf32>
    %18 = arith.subf %17, %16 : vector<37x1xf32>
    %cst_5 = arith.constant 0.000000e+00 : f32
    %19 = vector.broadcast %cst_5 : f32 to vector<37x1xf32>
    %20 = arith.subf %19, %18 : vector<37x1xf32>
    %21 = math.exp %20 : vector<37x1xf32>
    %cst_6 = arith.constant 1.000000e+00 : f32
    %22 = vector.broadcast %cst_6 : f32 to vector<37x1xf32>
    %23 = arith.subf %22, %21 : vector<37x1xf32>
    %cst_7 = arith.constant 0.000000e+00 : f32
    %24 = vector.broadcast %cst_7 : f32 to vector<37x1xf32>
    %25 = arith.maximumf %23, %24 : vector<37x1xf32>
    %26 = arith.mulf %25, %18 : vector<37x1xf32>
    %c37_i32 = arith.constant 37 : i32
    %27 = arith.muli %arg0, %c37_i32 : i32
    %28 = tpu.iota {dimensions = array<i32: 0>} : vector<37x1xi32>
    %29 = vector.broadcast %27 : i32 to vector<37x1xi32>
    %30 = arith.addi %29, %28 : vector<37x1xi32>
    %c37_i32_8 = arith.constant 37 : i32
    %31 = vector.broadcast %c37_i32_8 : i32 to vector<37x1xi32>
    %32 = arith.cmpi slt, %30, %31 : vector<37x1xi32>
    %cst_9 = arith.constant 0.000000e+00 : f32
    %33 = vector.broadcast %cst_9 : f32 to vector<37x1xf32>
    %34 = arith.select %32, %26, %33 : vector<37x1xi1>, vector<37x1xf32>
    %cst_10 = arith.constant dense<0.000000e+00> : vector<1xf32>
    %35 = vector.multi_reduction <add>, %34, %cst_10 [0] : vector<37x1xf32> to vector<1xf32>
    %36 = vector.shape_cast %35 : vector<1xf32> to vector<1x1xf32>
    %c0_11 = arith.constant 0 : index
    %c0_12 = arith.constant 0 : index
    %37 = vector.load %arg3[%c0_11, %c0_12] : memref<1x1xf32, #tpu.memory_space<vmem>>, vector<1x1xf32>
    tpu.vector_store %arg3[%c0_11, %c0_12], %36 {strides = array<i32>} : memref<1x1xf32, #tpu.memory_space<vmem>>, vector<1x1xf32>,
    return
  }
  func.func @transform_0(%arg0: i32) -> (i32, i32) {
    %c0_i32 = arith.constant 0 : i32
    %c0_i32_0 = arith.constant 0 : i32
    return %arg0, %c0_i32 : i32, i32
  }
  func.func @transform_1(%arg0: i32) -> (i32, i32) {
    %c0_i32 = arith.constant 0 : i32
    %c0_i32_0 = arith.constant 0 : i32
    return %arg0, %c0_i32 : i32, i32
  }
  func.func @transform_2(%arg0: i32) -> (i32, i32) {
    %c0_i32 = arith.constant 0 : i32
    %c0_i32_0 = arith.constant 0 : i32
    return %arg0, %c0_i32 : i32, i32
  }
}

</mosaic_0001>

<llo_original>
// kernel: focal_loss.1
$region0: #{focal_loss.1}
  #allocation0 [shape = 'u32[]', space=smem, size = 0x4, offset = 0x4, fixed_abs, tag = 'smem constant byte address 0x4 - core index']
  #allocation1 [shape = 'u32[144,128]{1,0:T(1,128)}', space=vmem, size = 0x12000, scoped, tag = 'internal scratch']
  %s0 = inlined_call_operand.vmem [shape: f32[37,81], index: 0, kind: input, shape index: {}]
  %s1 = inlined_call_operand.vmem [shape: s32[37,1], index: 1, kind: input, shape index: {}]
  %s2 = inlined_call_operand.hbm [shape: f32[1,1], index: 2, kind: output, shape index: {}]
  %s3 = sld [smem:[#allocation0]]
  $region18: #{focal_loss.1} parent=0
    _
  %s5 = ssub.s32 1, %s3
  %s6 = scalar_select 0, %s5, %s3
  $region1: #{focal_loss.1} parent=0
    #allocation2 [shape = 'u8[512]{0}', space=vmem, size = 0x400, scoped, tag = 'output window, operand 0, single buffered']
    #allocation3 [shape = 's32[1]{0}', space=sflag, size = 0x4, scoped, tag = 'scoped memory for focal_loss.1']
    %7 = vsyncpa [#allocation3], 0
    // Predicated region
    $region2: #{focal_loss.1} parent=1 // pred_check
      _
    $region3: #{focal_loss.1} parent=1 // pred_check_branch
      %9 = sbr.rel (0) target = $region5
    $region4: #{focal_loss.1} parent=1 // pred_region
      _
    $region5: #{focal_loss.1} parent=1 // pred_fallthru
      _
    // Predicated region
    $region6: #{focal_loss.1} parent=1 // pred_check
      _
    $region7: #{focal_loss.1} parent=1 // pred_check_branch
      %11 = sbr.rel (0) target = $region9
    $region8: #{focal_loss.1} parent=1 // pred_region
      _
    $region9: #{focal_loss.1} parent=1 // pred_fallthru
      _
    %v12 = vld [vmem:[%s0] sm:$0xff]
    %v13 = vld [vmem:[%s0 + $0x8] sm:$0xff]
    %v14 = vld [vmem:[%s0 + $0x10] sm:$0xff]
    %v15 = vld [vmem:[%s0 + $0x18] sm:$0xff]
    %v16 = vld [vmem:[%s0 + $0x20] sm:$0x1f]
    %v17 = vld [vmem:[%s1] sm:$0xff]
    %v18 = vld [vmem:[%s1 + $0x8] sm:$0xff]
    %v19 = vld [vmem:[%s1 + $0x10] sm:$0xff]
    %v20 = vld [vmem:[%s1 + $0x18] sm:$0xff]
    %v21 = vld [vmem:[%s1 + $0x20] sm:$0x1f]
    %v22 = vlaneseq
    %v23 = vand.u32 %v22, 127
    %24 = vset.pattern.permute.xlu0 0
    %25 = vperm.xlu0 %24, %v17
    %v26 = vpop.permute.xlu0 %25
    %27 = vset.pattern.permute.xlu0 0
    %28 = vperm.xlu0 %27, %v18
    %v29 = vpop.permute.xlu0 %28
    %30 = vset.pattern.permute.xlu0 0
    %31 = vperm.xlu0 %30, %v19
    %v32 = vpop.permute.xlu0 %31
    %33 = vset.pattern.permute.xlu0 0
    %34 = vperm.xlu0 %33, %v20
    %v35 = vpop.permute.xlu0 %34
    %36 = vset.pattern.permute.xlu0 0
    %37 = vperm.xlu0 %36, %v21
    %v38 = vpop.permute.xlu0 %37
    %vm39 = vcmp.eq.s32.totalorder %v23, %v26
    %vm40 = vcmp.eq.s32.totalorder %v23, %v29
    %vm41 = vcmp.eq.s32.totalorder %v23, %v32
    %vm42 = vcmp.eq.s32.totalorder %v23, %v35
    %vm43 = vcmp.eq.s32.totalorder %v23, %v38
    %vm44 = vcmask 662528
    %v45 = vsel %vm44, %v12, -inf
    %46 = vmax.xlane.f32.xlu0 %v45
    %v47 = vpop.xlane.xlu0 %46
    %v48 = vsel %vm44, %v13, -inf
    %49 = vmax.xlane.f32.xlu0 %v48
    %v50 = vpop.xlane.xlu0 %49
    %v51 = vsel %vm44, %v14, -inf
    %52 = vmax.xlane.f32.xlu0 %v51
    %v53 = vpop.xlane.xlu0 %52
    %v54 = vsel %vm44, %v15, -inf
    %55 = vmax.xlane.f32.xlu0 %v54
    %v56 = vpop.xlane.xlu0 %55
    %vm57 = vcmask 659456
    %v58 = vsel %vm57, %v16, -inf
    %59 = vmax.xlane.f32.xlu0 %v58
    %v60 = vpop.xlane.xlu0 %59
    %v61 = vsub.f32 %v12, %v47
    %v62 = vsub.f32 %v13, %v50
    %v63 = vsub.f32 %v14, %v53
    %v64 = vsub.f32 %v15, %v56
    %v65 = vsub.f32 %v16, %v60
    %v66 = vmul.f32 %v61, 1.442695
    %v67 = vpow.pop %v66
    %v68 = vmul.f32 %v62, 1.442695
    %v69 = vpow.pop %v68
    %v70 = vmul.f32 %v63, 1.442695
    %v71 = vpow.pop %v70
    %v72 = vmul.f32 %v64, 1.442695
    %v73 = vpow.pop %v72
    %v74 = vmul.f32 %v65, 1.442695
    %v75 = vpow.pop %v74
    %v76 = vsel %vm44, %v67, 0.0
    %77 = vadd.xlane.f32.xlu0 %v76
    %v78 = vpop.xlane.xlu0 %77
    %v79 = vsel %vm44, %v69, 0.0
    %80 = vadd.xlane.f32.xlu0 %v79
    %v81 = vpop.xlane.xlu0 %80
    %v82 = vsel %vm44, %v71, 0.0
    %83 = vadd.xlane.f32.xlu0 %v82
    %v84 = vpop.xlane.xlu0 %83
    %v85 = vsel %vm44, %v73, 0.0
    %86 = vadd.xlane.f32.xlu0 %v85
    %v87 = vpop.xlane.xlu0 %86
    %v88 = vsel %vm57, %v75, 0.0
    %89 = vadd.xlane.f32.xlu0 %v88
    %v90 = vpop.xlane.xlu0 %89
    %v91 = vsel %vm39, %v61, 0.0
    %v92 = vsel %vm40, %v62, 0.0
    %v93 = vsel %vm41, %v63, 0.0
    %v94 = vsel %vm42, %v64, 0.0
    %v95 = vsel %vm43, %v65, 0.0
    %v96 = vsel %vm44, %v91, 0.0
    %97 = vadd.xlane.f32.xlu0 %v96
    %v98 = vpop.xlane.xlu0 %97
    %v99 = vsel %vm44, %v92, 0.0
    %100 = vadd.xlane.f32.xlu0 %v99
    %v101 = vpop.xlane.xlu0 %100
    %v102 = vsel %vm44, %v93, 0.0
    %103 = vadd.xlane.f32.xlu0 %v102
    %v104 = vpop.xlane.xlu0 %103
    %v105 = vsel %vm44, %v94, 0.0
    %106 = vadd.xlane.f32.xlu0 %v105
    %v107 = vpop.xlane.xlu0 %106
    %v108 = vsel %vm57, %v95, 0.0
    %109 = vadd.xlane.f32.xlu0 %v108
    %v110 = vpop.xlane.xlu0 %109
    %v111 = vlog2.pop %v78
    %v112 = vmul.f32 %v111, 0.6931472
    %v113 = vlog2.pop %v81
    %v114 = vmul.f32 %v113, 0.6931472
    %v115 = vlog2.pop %v84
    %v116 = vmul.f32 %v115, 0.6931472
    %v117 = vlog2.pop %v87
    %v118 = vmul.f32 %v117, 0.6931472
    %v119 = vlog2.pop %v90
    %v120 = vmul.f32 %v119, 0.6931472
    %v121 = vsub.f32 %v112, %v98
    %v122 = vsub.f32 %v114, %v101
    %v123 = vsub.f32 %v116, %v104
    %v124 = vsub.f32 %v118, %v107
    %v125 = vsub.f32 %v120, %v110
    %v126 = vsub.f32 0.0, %v121
    %v127 = vsub.f32 0.0, %v122
    %v128 = vsub.f32 0.0, %v123
    %v129 = vsub.f32 0.0, %v124
    %v130 = vsub.f32 0.0, %v125
    %v131 = vmul.f32 %v126, 1.442695
    %v132 = vpow.pop %v131
    %v133 = vmul.f32 %v127, 1.442695
    %v134 = vpow.pop %v133
    %v135 = vmul.f32 %v128, 1.442695
    %v136 = vpow.pop %v135
    %v137 = vmul.f32 %v129, 1.442695
    %v138 = vpow.pop %v137
    %v139 = vmul.f32 %v130, 1.442695
    %v140 = vpow.pop %v139
    %v141 = vsub.f32 1.0, %v132
    %v142 = vsub.f32 1.0, %v134
    %v143 = vsub.f32 1.0, %v136
    %v144 = vsub.f32 1.0, %v138
    %v145 = vsub.f32 1.0, %v140
    %v146 = vmax.f32 %v141, 0.0
    %v147 = vmax.f32 %v142, 0.0
    %v148 = vmax.f32 %v143, 0.0
    %v149 = vmax.f32 %v144, 0.0
    %v150 = vmax.f32 %v145, 0.0
    %v151 = vmul.f32 %v146, %v121
    %v152 = vmul.f32 %v147, %v122
    %v153 = vmul.f32 %v148, %v123
    %v154 = vmul.f32 %v149, %v124
    %v155 = vmul.f32 %v150, %v125
    %s156 = smul.u32 0, 37
    %v157 = vlaneseq
    %v158 = vshrl.u32 %v157, 7
    %v159 = vadd.s32 %v158, 8
    %v160 = vadd.s32 %v158, 16
    %v161 = vadd.s32 %v158, 24
    %v162 = vadd.s32 %v158, 32
    %v163 = vstv %s156
    %v164 = vadd.s32 %v163, %v158
    %v165 = vadd.s32 %v163, %v159
    %v166 = vadd.s32 %v163, %v160
    %v167 = vadd.s32 %v163, %v161
    %v168 = vadd.s32 %v163, %v162
    %vm169 = vcmp.lt.s32.totalorder %v164, 37
    %vm170 = vcmp.lt.s32.totalorder %v165, 37
    %vm171 = vcmp.lt.s32.totalorder %v166, 37
    %vm172 = vcmp.lt.s32.totalorder %v167, 37
    %vm173 = vcmp.lt.s32.totalorder %v168, 37
    %v174 = vsel %vm169, %v151, 0.0
    %v175 = vsel %vm170, %v152, 0.0
    %v176 = vsel %vm171, %v153, 0.0
    %v177 = vsel %vm172, %v154, 0.0
    %v178 = vsel %vm173, %v155, 0.0
    %v179 = vadd.f32 %v174, %v175
    %v180 = vadd.f32 %v179, %v176
    %v181 = vadd.f32 %v180, %v177
    %vm182 = vcmask 1044480
    %v183 = vsel %vm182, %v178, 0.0
    %v184 = vadd.f32 %v181, %v183
    %v185 = vrot.slane %v184, 4
    %v186 = vadd.f32 %v184, %v185
    %v187 = vrot.slane %v186, 2
    %v188 = vadd.f32 %v186, %v187
    %v189 = vrot.slane %v188, 1
    %v190 = vadd.f32 %v188, %v189
    %vm191 = vcmask 0
    %192 = vst.msk [vmem:[#allocation2] sm:$0x1] %vm191, %v190
    // Predicated region
    $region10: #{focal_loss.1} parent=1 // pred_check
      _
    $region11: #{focal_loss.1} parent=1 // pred_check_branch
      %194 = sbr.rel (0) target = $region13
    $region12: #{focal_loss.1} parent=1 // pred_region
      %s196 = ssub.s32 16, 16
      %197 = vsyncadd [#allocation3], %s196
      %s199 = sshll.u32 [#allocation2], 4
      %s200 = int_to_ptr.vmem [resolvable:$true] %s199
      %202 = dma.vmem_to_hbm [thread:$0]  %s200, 16, %s2, [#allocation3]
    $region13: #{focal_loss.1} parent=1 // pred_fallthru
      _
    // Predicated region
    $region14: #{focal_loss.1} parent=1 // pred_check
      _
    $region15: #{focal_loss.1} parent=1 // pred_check_branch
      %204 = sbr.rel (0) target = $region17
    $region16: #{focal_loss.1} parent=1 // pred_region
      %205 = dma.done [#allocation3], 16
    $region17: #{focal_loss.1} parent=1 // pred_fallthru
      _
    %206 = vsyncpa [#allocation3], 1

</llo_original>
